<compile_context>
chip_gen: v5e
topology: v5e:2x2
jax: 0.10.0
libtpu: 0.0.40
codegen_flags: <defaults>
</compile_context>

<pallas_src>
import jax
import jax.numpy as jnp
from jax.experimental import pallas as pl
from jax.experimental.pallas import tpu as pltpu


def _round_up(x, m):
    return (x + m - 1) // m * m


def _choose_tiles(n):
    """Return (n_pad, tm, tk): padded node count, row tile, reduction tile."""
    if n <= 256:
        # Tiny graph: one fused grid step; 16-row multiple for bf16 sublane packing.
        n_pad = _round_up(max(n, 16), 16)
        return n_pad, n_pad, n_pad
    # Largest MXU-friendly row tile that wastes <= ~15% padding (fallback 128).
    tm = 128
    for t in (512, 256):
        if _round_up(n, t) <= int(n * 1.15):
            tm = t
            break
    n_pad = _round_up(n, tm)
    # Keep >= 2 row tiles so the "parallel" axis can feed both v7x TensorCores.
    while n_pad // tm < 2 and tm > 128:
        tm //= 2
    # Reduction tile: largest multiple of tm dividing n_pad with the
    # double-buffered bf16 A tile staying under ~4 MiB (v5e / v7x VMEM safe).
    n_row_tiles = n_pad // tm
    max_cols = min(2048, (4 * 1024 * 1024) // (2 * tm))
    c = 1
    for cand in range(n_row_tiles, 0, -1):
        if n_row_tiles % cand == 0 and cand * tm <= max_cols:
            c = cand
            break
    return n_pad, tm, c * tm


def build_normalized_adjacency(edge_index, num_nodes, *, n_pad=None,
                               dtype=jnp.float32):
    """Dense D^-1/2 (A + I) D^-1/2, matching PyG gcn_norm with
    add_remaining_self_loops (existing self-loops dropped, one unit self-loop per
    node; duplicate non-self edges accumulate). Built directly at the padded
    shape / target dtype so no extra O(N^2) pad/cast passes are needed."""
    n_pad = num_nodes if n_pad is None else n_pad
    src = edge_index[0].astype(jnp.int32)
    dst = edge_index[1].astype(jnp.int32)
    ew = jnp.where(src != dst, 1.0, 0.0).astype(jnp.float32)   # drop self-loops
    deg = jnp.ones((num_nodes,), jnp.float32).at[dst].add(ew)  # +1 unit self-loop
    dis = jnp.where(deg > 0, jax.lax.rsqrt(deg), 0.0)
    norm = dis[src] * ew * dis[dst]
    idx = jnp.arange(num_nodes, dtype=jnp.int32)
    a = jnp.zeros((n_pad, n_pad), dtype)
    a = a.at[dst, src].add(norm.astype(dtype))                  # scattered edges
    a = a.at[idx, idx].add((dis * dis).astype(dtype))           # unit self-loops
    return a


# ---------------------------------------------------------------------------
# Fused kernel:  O[i-tile] = relu( sum_k A[i,k] @ (X[k] @ W) + b )
#   grid = (row tiles i [parallel], reduction tiles k [arbitrary, last])
# ---------------------------------------------------------------------------
def gcn_fused_kernel(x_ref, w_ref, a_ref, b_ref, o_ref):
    k = pl.program_id(1)

    @pl.when(k == 0)
    def _():
        o_ref[...] = jnp.zeros_like(o_ref)

    # Fused feature transform: the (tk, C_pad) XW slice is recomputed each k
    # step (F_in is tiny, ~1-2% extra MXU work on a memory-bound kernel)
    # instead of round-tripping an N x C intermediate through HBM.
    xw = jnp.dot(x_ref[...], w_ref[...],
                 preferred_element_type=jnp.float32).astype(jnp.bfloat16)

    # f32 accumulation directly into the resident output block (its index_map
    # ignores k), so no VMEM scratch accumulator / finalize copy is needed.
    o_ref[...] += jnp.dot(a_ref[...], xw, preferred_element_type=jnp.float32)

    @pl.when(k == pl.num_programs(1) - 1)
    def _():
        o_ref[...] = jnp.maximum(o_ref[...] + b_ref[...], 0.0)


def gcn_forward_pallas(x, edge_index, w, b):
    """relu(A_hat @ X @ W + b) via one fused tiled Pallas kernel. Returns [N, C] f32."""
    N, F_in = x.shape
    C = w.shape[1]

    n_pad, tm, tk = _choose_tiles(N)
    c_pad = _round_up(C, 128)  # lane-dense output -> unmasked vector stores

    # Operands built directly at padded shapes / MXU dtypes (single pass each).
    a_p = build_normalized_adjacency(edge_index, N, n_pad=n_pad, dtype=jnp.bfloat16)
    x_p = jnp.zeros((n_pad, F_in), jnp.bfloat16).at[:N, :].set(x.astype(jnp.bfloat16))
    w_p = jnp.zeros((F_in, c_pad), jnp.bfloat16).at[:, :C].set(w.astype(jnp.bfloat16))
    b_p = jnp.zeros((1, c_pad), jnp.float32).at[0, :C].set(b.astype(jnp.float32))

    n_row_tiles = n_pad // tm
    cost = pl.CostEstimate(
        flops=int(2 * n_pad * n_pad * c_pad
                  + 2 * n_row_tiles * n_pad * F_in * c_pad),
        transcendentals=0,
        bytes_accessed=int(n_pad * n_pad * 2                  # A_hat (dominant)
                           + n_row_tiles * n_pad * F_in * 2   # X re-read per row tile
                           + F_in * c_pad * 2 + c_pad * 4     # W, bias (resident)
                           + n_pad * c_pad * 4))              # output

    out = pl.pallas_call(
        gcn_fused_kernel,
        out_shape=jax.ShapeDtypeStruct((n_pad, c_pad), jnp.float32),
        grid=(n_row_tiles, n_pad // tk),
        in_specs=[
            pl.BlockSpec((tk, F_in), lambda i, k: (k, 0)),      # X k-slice
            pl.BlockSpec((F_in, c_pad), lambda i, k: (0, 0)),   # W (VMEM resident)
            pl.BlockSpec((tm, tk), lambda i, k: (i, k)),        # A_hat tile
            pl.BlockSpec((1, c_pad), lambda i, k: (0, 0)),      # bias (resident)
        ],
        out_specs=pl.BlockSpec((tm, c_pad), lambda i, k: (i, 0)),  # accumulator
        compiler_params=pltpu.CompilerParams(
            dimension_semantics=("parallel", "arbitrary")),
        cost_estimate=cost,
    )(x_p, w_p, a_p, b_p)

    # Padded rows/cols are relu(b) garbage; slicing them off is load-bearing.
    return out[:N, :C]


class GCNPallas:
    """Mirrors the PyTorch GCN module: relu(GCNConv(x, edge_index)) -> flatten."""

    def __init__(self, node_features, single_emb, key):
        # Glorot-uniform init (GCNConv default), zero bias — deterministic.
        limit = jnp.sqrt(6.0 / (node_features + single_emb))
        self.weight = jax.random.uniform(
            key, (node_features, single_emb), jnp.float32, -limit, limit)
        self.bias = jnp.zeros((single_emb,), jnp.float32)

    def __call__(self, x, edge_index):
        h = gcn_forward_pallas(x, edge_index, self.weight, self.bias)  # relu inside
        if h.ndim == 3:
            return h.reshape(h.shape[0], -1)   # torch.flatten(x, 1)
        return h.reshape(-1)                   # torch.flatten(x)


if __name__ == "__main__":
    key = jax.random.PRNGKey(0)
    k_x, k_p = jax.random.split(key)

    N = 16             # number of graph nodes
    node_features = 8
    single_emb = 32

    # Deterministic node features.
    x = jax.random.normal(k_x, (N, node_features), jnp.float32)

    # Deterministic ring graph, both directions: [2, 2N] edge_index.
    idx = jnp.arange(N, dtype=jnp.int32)
    nxt = (idx + 1) % N
    edge_index = jnp.concatenate(
        [jnp.stack([idx, nxt], axis=0), jnp.stack([nxt, idx], axis=0)], axis=1)

    model = GCNPallas(node_features, single_emb, k_p)
    state_emb = model(x, edge_index)
    jax.block_until_ready(state_emb)

    # Shape / sign checks + loose numeric check vs. plain-JAX f32 reference
    # (loose tolerance because MXU operands are bf16).
    a_hat = build_normalized_adjacency(edge_index, N)   # f32, unpadded reference
    ref = jnp.maximum(a_hat @ (x @ model.weight) + model.bias, 0.0).reshape(-1)
    assert state_emb.shape == (N * single_emb,)
    assert bool(jnp.all(state_emb >= 0.0))              # ReLU output
    assert bool(jnp.allclose(state_emb, ref, rtol=6e-2, atol=6e-2))
    print("KERNEL_OK")
</pallas_src>

<mosaic_0001>
module attributes {stable_mosaic.version = 11 : i64} {
  func.func @gcn_fused_kernel(%arg0: i32, %arg1: i32, %arg2: memref<16x8xbf16, #tpu.memory_space<vmem>>, %arg3: memref<8x128xbf16, #tpu.memory_space<vmem>>, %arg4: memref<16x16xbf16, #tpu.memory_space<vmem>>, %arg5: memref<1x128xf32, #tpu.memory_space<vmem>>, %arg6: memref<16x128xf32, #tpu.memory_space<vmem>>) attributes {dimension_semantics = [#tpu.dimension_semantics<parallel>, #tpu.dimension_semantics<arbitrary>], iteration_bounds = array<i64: 1, 1>, scalar_prefetch = 0 : i64, scratch_operands = 0 : i64, tpu.core_type = #tpu.core_type<tc>, window_params = [{transform_indices = @transform_0, window_bounds = array<i64: 16, 8>}, {pipeline_mode = #tpu.pipeline_mode<synchronous>, transform_indices = @transform_1, window_bounds = array<i64: 8, 128>}, {transform_indices = @transform_2, window_bounds = array<i64: 16, 16>}, {pipeline_mode = #tpu.pipeline_mode<synchronous>, transform_indices = @transform_3, window_bounds = array<i64: 1, 128>}, {transform_indices = @transform_4, window_bounds = array<i64: 16, 128>}]} {
    %c0_i32 = arith.constant 0 : i32
    %0 = arith.cmpi eq, %arg1, %c0_i32 : i32
    %1 = arith.extui %0 : i1 to i32
    %c0_i32_0 = arith.constant 0 : i32
    %2 = arith.cmpi ne, %1, %c0_i32_0 : i32
    scf.if %2 {
      %cst_13 = arith.constant 0.000000e+00 : f32
      %15 = vector.broadcast %cst_13 : f32 to vector<16x128xf32>
      %c0_14 = arith.constant 0 : index
      %c0_15 = arith.constant 0 : index
      %16 = vector.load %arg6[%c0_14, %c0_15] : memref<16x128xf32, #tpu.memory_space<vmem>>, vector<16x128xf32>
      tpu.vector_store %arg6[%c0_14, %c0_15], %15 {strides = array<i32>} : memref<16x128xf32, #tpu.memory_space<vmem>>, vector<16x128xf32>,
    } else {
    }
    %c0 = arith.constant 0 : index
    %c0_1 = arith.constant 0 : index
    %3 = vector.load %arg2[%c0, %c0_1] : memref<16x8xbf16, #tpu.memory_space<vmem>>, vector<16x8xbf16>
    %c0_2 = arith.constant 0 : index
    %c0_3 = arith.constant 0 : index
    %4 = vector.load %arg3[%c0_2, %c0_3] : memref<8x128xbf16, #tpu.memory_space<vmem>>, vector<8x128xbf16>
    %cst = arith.constant dense<0.000000e+00> : vector<16x128xf32>
    %5 = tpu.matmul %3, %4, %cst {dimension_numbers = #tpu.dot_dimension_numbers<[1], [0], [0], [1], [0, 0, 1, 1], [], []>} : vector<16x8xbf16>, vector<8x128xbf16>, vector<16x128xf32> -> vector<16x128xf32>
    %6 = arith.truncf %5 : vector<16x128xf32> to vector<16x128xbf16>
    %c0_4 = arith.constant 0 : index
    %c0_5 = arith.constant 0 : index
    %7 = vector.load %arg6[%c0_4, %c0_5] : memref<16x128xf32, #tpu.memory_space<vmem>>, vector<16x128xf32>
    %c0_6 = arith.constant 0 : index
    %c0_7 = arith.constant 0 : index
    %8 = vector.load %arg4[%c0_6, %c0_7] : memref<16x16xbf16, #tpu.memory_space<vmem>>, vector<16x16xbf16>
    %cst_8 = arith.constant dense<0.000000e+00> : vector<16x128xf32>
    %9 = tpu.matmul %8, %6, %cst_8 {dimension_numbers = #tpu.dot_dimension_numbers<[1], [0], [0], [1], [0, 0, 1, 1], [], []>} : vector<16x16xbf16>, vector<16x128xbf16>, vector<16x128xf32> -> vector<16x128xf32>
    %10 = arith.addf %7, %9 : vector<16x128xf32>
    %c0_9 = arith.constant 0 : index
    %c0_10 = arith.constant 0 : index
    %11 = vector.load %arg6[%c0_9, %c0_10] : memref<16x128xf32, #tpu.memory_space<vmem>>, vector<16x128xf32>
    tpu.vector_store %arg6[%c0_9, %c0_10], %10 {strides = array<i32>} : memref<16x128xf32, #tpu.memory_space<vmem>>, vector<16x128xf32>,
    %c0_i32_11 = arith.constant 0 : i32
    %12 = arith.cmpi eq, %arg1, %c0_i32_11 : i32
    %13 = arith.extui %12 : i1 to i32
    %c0_i32_12 = arith.constant 0 : i32
    %14 = arith.cmpi ne, %13, %c0_i32_12 : i32
    scf.if %14 {
      %c0_13 = arith.constant 0 : index
      %c0_14 = arith.constant 0 : index
      %15 = vector.load %arg6[%c0_13, %c0_14] : memref<16x128xf32, #tpu.memory_space<vmem>>, vector<16x128xf32>
      %c0_15 = arith.constant 0 : index
      %c0_16 = arith.constant 0 : index
      %16 = vector.load %arg5[%c0_15, %c0_16] : memref<1x128xf32, #tpu.memory_space<vmem>>, vector<1x128xf32>
      %17 = vector.broadcast %16 : vector<1x128xf32> to vector<16x128xf32>
      %18 = arith.addf %15, %17 : vector<16x128xf32>
      %cst_17 = arith.constant 0.000000e+00 : f32
      %19 = vector.broadcast %cst_17 : f32 to vector<16x128xf32>
      %20 = arith.maximumf %18, %19 : vector<16x128xf32>
      %c0_18 = arith.constant 0 : index
      %c0_19 = arith.constant 0 : index
      %21 = vector.load %arg6[%c0_18, %c0_19] : memref<16x128xf32, #tpu.memory_space<vmem>>, vector<16x128xf32>
      tpu.vector_store %arg6[%c0_18, %c0_19], %20 {strides = array<i32>} : memref<16x128xf32, #tpu.memory_space<vmem>>, vector<16x128xf32>,
    } else {
    }
    return
  }
  func.func @transform_0(%arg0: i32, %arg1: i32) -> (i32, i32) {
    %c0_i32 = arith.constant 0 : i32
    %c0_i32_0 = arith.constant 0 : i32
    return %arg1, %c0_i32 : i32, i32
  }
  func.func @transform_1(%arg0: i32, %arg1: i32) -> (i32, i32) {
    %c0_i32 = arith.constant 0 : i32
    %c0_i32_0 = arith.constant 0 : i32
    %c0_i32_1 = arith.constant 0 : i32
    return %c0_i32, %c0_i32_0 : i32, i32
  }
  func.func @transform_2(%arg0: i32, %arg1: i32) -> (i32, i32) {
    %c0_i32 = arith.constant 0 : i32
    return %arg0, %arg1 : i32, i32
  }
  func.func @transform_3(%arg0: i32, %arg1: i32) -> (i32, i32) {
    %c0_i32 = arith.constant 0 : i32
    %c0_i32_0 = arith.constant 0 : i32
    %c0_i32_1 = arith.constant 0 : i32
    return %c0_i32, %c0_i32_0 : i32, i32
  }
  func.func @transform_4(%arg0: i32, %arg1: i32) -> (i32, i32) {
    %c0_i32 = arith.constant 0 : i32
    %c0_i32_0 = arith.constant 0 : i32
    return %arg0, %c0_i32 : i32, i32
  }
}

</mosaic_0001>

<llo_original>
// kernel: tpu_custom_call.1
$region0: #{tpu_custom_call.1}
  #allocation0 [shape = 'u32[]', space=smem, size = 0x4, offset = 0x4, fixed_abs, tag = 'smem constant byte address 0x4 - core index']
  #allocation1 [shape = 'u32[72,128]{1,0:T(1,128)}', space=vmem, size = 0x9000, scoped, tag = 'internal scratch']
  %s0 = inlined_call_operand.vmem [shape: bf16[16,8], index: 0, kind: input, shape index: {}]
  %s1 = inlined_call_operand.vmem [shape: bf16[8,128], index: 1, kind: input, shape index: {}]
  %s2 = inlined_call_operand.vmem [shape: bf16[16,16], index: 2, kind: input, shape index: {}]
  %s3 = inlined_call_operand.vmem [shape: f32[1,128], index: 3, kind: input, shape index: {}]
  %s4 = inlined_call_operand.hbm [shape: f32[16,128], index: 4, kind: output, shape index: {}]
  %s5 = sld [smem:[#allocation0]]
  $region34: #{tpu_custom_call.1} parent=0
    _
  %s7 = ssub.s32 1, %s5
  %s8 = scalar_select 0, %s7, %s5
  $region1: #{tpu_custom_call.1} parent=0
    #allocation2 [shape = 'u8[8192]{0}', space=vmem, size = 0x2000, scoped, tag = 'output window, operand 0, single buffered']
    #allocation3 [shape = 's32[1]{0}', space=sflag, size = 0x4, scoped, tag = 'scoped memory for tpu_custom_call.1']
    %9 = vsyncpa [#allocation3], 0
    // Predicated region
    $region2: #{tpu_custom_call.1} parent=1 // pred_check
      _
    $region3: #{tpu_custom_call.1} parent=1 // pred_check_branch
      %11 = sbr.rel (0) target = $region5
    $region4: #{tpu_custom_call.1} parent=1 // pred_region
      _
    $region5: #{tpu_custom_call.1} parent=1 // pred_fallthru
      _
    // Predicated region
    $region6: #{tpu_custom_call.1} parent=1 // pred_check
      _
    $region7: #{tpu_custom_call.1} parent=1 // pred_check_branch
      %13 = sbr.rel (0) target = $region9
    $region8: #{tpu_custom_call.1} parent=1 // pred_region
      _
    $region9: #{tpu_custom_call.1} parent=1 // pred_fallthru
      _
    // Predicated region
    $region10: #{tpu_custom_call.1} parent=1 // pred_check
      _
    $region11: #{tpu_custom_call.1} parent=1 // pred_check_branch
      %15 = sbr.rel (0) target = $region13
    $region12: #{tpu_custom_call.1} parent=1 // pred_region
      _
    $region13: #{tpu_custom_call.1} parent=1 // pred_fallthru
      _
    // Predicated region
    $region14: #{tpu_custom_call.1} parent=1 // pred_check
      _
    $region15: #{tpu_custom_call.1} parent=1 // pred_check_branch
      %17 = sbr.rel (0) target = $region17
    $region16: #{tpu_custom_call.1} parent=1 // pred_region
      _
    $region17: #{tpu_custom_call.1} parent=1 // pred_fallthru
      _
    %p19 = scmp.eq.s32.totalorder 0, 0
    // Predicated region
    $region18: #{tpu_custom_call.1} parent=1 // pred_check
      %p20 = pneg %p19
    $region19: #{tpu_custom_call.1} parent=1 // pred_check_branch
      %22 = sbr.rel (%p20) target = $region21
    $region20: #{tpu_custom_call.1} parent=1 // pred_region
      %23 = vst [vmem:[#allocation2] sm:$0xff] 0.0
      %24 = vst [vmem:[#allocation2 + $0x8] sm:$0xff] 0.0
    $region21: #{tpu_custom_call.1} parent=1 // pred_fallthru
      _
    %v25 = vld [vmem:[%s0] sm:$0xf]
    %v26 = vld [vmem:[%s0 + $0x4] sm:$0xf]
    %v27 = vld [vmem:[%s1] sm:$0xf]
    %v30 = vunpack.c.l.b16 %v25
    %v31 = vunpack.c.l.b16 %v26
    %v32 = vpack.c.b16 %v31, %v30
    %vm33 = vcmask 64512
    %v35 = vsel %vm33, %v32, 0
    %vm37 = vcmask 1043456
    %v39 = vsel %vm37, %v27, 0
    %41 = vmatpush.bf16.msra.mxu0 0
    %42 = vmatpush.bf16.msra.mxu0 0
    %43 = vmatpush.bf16.msra.mxu0 0
    %44 = vmatpush.bf16.msra.mxu0 0
    %45 = vmatpush.bf16.msra.mxu0 0
    %46 = vmatpush.bf16.msra.mxu0 0
    %47 = vmatpush.bf16.msra.mxu0 0
    %48 = vmatpush.bf16.msra.mxu0 %v39
    %49 = vmatmul.bf16.gmra.mxu0 %v35
    %v50 = vpop.f32.mrf.mxu0
    %v51 = vadd.f32 0.0, %v50
    %v52 = vpop.f32.mrf.mxu0
    %v53 = vadd.f32 0.0, %v52
    %54 = vdwg.mxu0
    %v55 = vpack.c.bf16 %v53, %v51
    %v56 = vld [vmem:[#allocation2] sm:$0xff]
    %v57 = vld [vmem:[#allocation2 + $0x8] sm:$0xff]
    %v58 = vld [vmem:[%s2] sm:$0xf]
    %v59 = vld [vmem:[%s2 + $0x4] sm:$0xf]
    %v62 = vunpack.c.l.b16 %v58
    %v63 = vunpack.c.l.b16 %v59
    %v64 = vpack.c.b16 %v63, %v62
    %vm65 = vcmask 130048
    %v67 = vsel %vm65, %v64, 0
    %69 = vmatpush.bf16.msra.mxu0 0
    %70 = vmatpush.bf16.msra.mxu0 0
    %71 = vmatpush.bf16.msra.mxu0 0
    %72 = vmatpush.bf16.msra.mxu0 0
    %73 = vmatpush.bf16.msra.mxu0 0
    %74 = vmatpush.bf16.msra.mxu0 0
    %75 = vmatpush.bf16.msra.mxu0 0
    %76 = vmatpush.bf16.msra.mxu0 %v55
    %77 = vmatmul.bf16.gmra.mxu0 %v67
    %v78 = vpop.f32.mrf.mxu0
    %v79 = vadd.f32 0.0, %v78
    %v80 = vpop.f32.mrf.mxu0
    %v81 = vadd.f32 0.0, %v80
    %82 = vdwg.mxu0
    %v83 = vadd.f32 %v56, %v79
    %v84 = vadd.f32 %v57, %v81
    %85 = vst [vmem:[#allocation2] sm:$0xff] %v83
    %86 = vst [vmem:[#allocation2 + $0x8] sm:$0xff] %v84
    // Predicated region
    $region22: #{tpu_custom_call.1} parent=1 // pred_check
      %p87 = pneg %p19
    $region23: #{tpu_custom_call.1} parent=1 // pred_check_branch
      %89 = sbr.rel (%p87) target = $region25
    $region24: #{tpu_custom_call.1} parent=1 // pred_region
      %v90 = vld [vmem:[#allocation2] sm:$0xff]
      %v91 = vld [vmem:[#allocation2 + $0x8] sm:$0xff]
      %v92 = vld [vmem:[%s3] sm:$0x1]
      %v94 = vperm.slane %v92, 0
      %v96 = vadd.f32 %v90, %v94
      %v97 = vadd.f32 %v91, %v94
      %v98 = vmax.f32 %v96, 0.0
      %v99 = vmax.f32 %v97, 0.0
      %100 = vst [vmem:[#allocation2] sm:$0xff] %v98
      %101 = vst [vmem:[#allocation2 + $0x8] sm:$0xff] %v99
    $region25: #{tpu_custom_call.1} parent=1 // pred_fallthru
      _
    // Predicated region
    $region26: #{tpu_custom_call.1} parent=1 // pred_check
      _
    $region27: #{tpu_custom_call.1} parent=1 // pred_check_branch
      %103 = sbr.rel (0) target = $region29
    $region28: #{tpu_custom_call.1} parent=1 // pred_region
      %105 = vsyncadd [#allocation3], 0
      %s106 = sshll.u32 [#allocation2], 4
      %s107 = int_to_ptr.vmem [resolvable:$true] %s106
      %s108 = sshll.u32 %s4, 4
      %s109 = int_to_ptr.hbm [resolvable:$true] %s108
      %114 = dma.vmem_to_hbm [thread:$0]  %s107, 256, %s109, [#allocation3], 128, 128, 8
    $region29: #{tpu_custom_call.1} parent=1 // pred_fallthru
      _
    // Predicated region
    $region30: #{tpu_custom_call.1} parent=1 // pred_check
      _
    $region31: #{tpu_custom_call.1} parent=1 // pred_check_branch
      %116 = sbr.rel (0) target = $region33
    $region32: #{tpu_custom_call.1} parent=1 // pred_region
      %118 = dma.done [#allocation3], 256
    $region33: #{tpu_custom_call.1} parent=1 // pred_fallthru
      _
    %119 = vsyncpa [#allocation3], 1

</llo_original>
